<compile_context>
chip_gen: v6e
topology: v6e:2x2x1
jax: 0.10.0
libtpu: 0.0.40
codegen_flags: <defaults>
</compile_context>

<pallas_src>
import jax
import jax.numpy as jnp
from jax import lax
from jax.experimental import pallas as pl
from jax.experimental.pallas import tpu as pltpu

LEAKY_SLOPE = 0.01
LN_EPS = 1e-5      # must stay > 0: zero-padded batch columns (var = 0) rely on it
LANES = 128


def _round_up(x, m):
    return -(-x // m) * m


def _leaky_relu(x):
    return jnp.where(x > 0, x, LEAKY_SLOPE * x)


def _layer_norm_cols(x, gamma, beta):
    """LayerNorm over the feature axis (axis 0 / sublanes); batch lives on lanes.

    One-pass biased statistics: var = E[x^2] - E[x]^2 (matches PyTorch LayerNorm).
    """
    mu = jnp.mean(x, axis=0, keepdims=True)
    m2 = jnp.mean(x * x, axis=0, keepdims=True)
    var = m2 - mu * mu
    return (x - mu) * lax.rsqrt(var + LN_EPS) * gamma + beta


def decoder_kernel(zt_ref,
                   w1_ref, v1_ref,          # v1 columns: [b1 | g1 | be1], shape (h1, 3)
                   w2_ref, v2_ref,          # v2 columns: [b2 | g2 | be2], shape (h2, 3)
                   wo_ref, bo_ref,
                   out_ref):
    x = zt_ref[...]                                            # (latent, block_b)

    # Hidden layer 1: Linear -> LeakyReLU -> LayerNorm -> Dropout (identity, eval)
    h = jnp.dot(w1_ref[...], x, preferred_element_type=jnp.float32) + v1_ref[:, 0:1]
    h = _leaky_relu(h)
    h = _layer_norm_cols(h, v1_ref[:, 1:2], v1_ref[:, 2:3])

    # Hidden layer 2
    h = jnp.dot(w2_ref[...], h, preferred_element_type=jnp.float32) + v2_ref[:, 0:1]
    h = _leaky_relu(h)
    h = _layer_norm_cols(h, v2_ref[:, 1:2], v2_ref[:, 2:3])

    # Output Linear: (out_dim, block_b) with batch on lanes -> lane-dense store,
    # no zero-column padding needed.
    out_ref[...] = (jnp.dot(wo_ref[...], h, preferred_element_type=jnp.float32)
                    + bo_ref[...]).astype(out_ref.dtype)


def decoder_forward(z, params, *, max_block_b=4096, out_dtype=None):
    """z: [B, latent_dim] float32 -> [B, output_dim].

    params use PyTorch nn.Linear layout: w*: [out, in]; b*, g*, be*: [out].
    out_dtype: set to jnp.bfloat16 to halve HBM writeback if acceptable downstream.
    """
    B, latent_dim = z.shape
    h1 = params["w1"].shape[0]
    h2 = params["w2"].shape[0]
    out_dim = params["wo"].shape[0]
    out_dtype = z.dtype if out_dtype is None else out_dtype

    max_block_b = max(LANES, _round_up(max_block_b, LANES))

    # ---- batch tiling: batch lives on the lane axis, so tiles are lane-aligned ----
    if B <= max_block_b:
        block_b = max(LANES, _round_up(B, LANES))      # single tile
        n_tiles = 1
    else:
        # >= 2 balanced tiles so ("parallel",) shards across both v7x TensorCores.
        n_tiles = max(2, -(-B // max_block_b))
        block_b = _round_up(-(-B // n_tiles), LANES)
    Bp = block_b * n_tiles

    # Transposed activation layout: features on sublanes, batch on lanes.
    zt = z.T                                            # (latent_dim, B)
    if Bp != B:
        # Zero columns: LayerNorm on them gives var=0, finite thanks to LN_EPS>0;
        # they are sliced off below.
        zt = jnp.pad(zt, ((0, 0), (0, Bp - B)))

    # Pack bias/gamma/beta per hidden layer into one small operand each.
    v1 = jnp.stack([params["b1"], params["g1"], params["be1"]], axis=1)   # (h1, 3)
    v2 = jnp.stack([params["b2"], params["g2"], params["be2"]], axis=1)   # (h2, 3)
    bo = params["bo"].reshape(out_dim, 1)

    def batch_spec(d):
        # Tile over the batch (lane) axis only; feature dim is the full array dim.
        return pl.BlockSpec((d, block_b), lambda i: (0, i))

    def full_spec(shape):
        # Weights / packed vectors: whole array resident, same block every step.
        return pl.BlockSpec(shape, lambda i: tuple(0 for _ in shape))

    out_t = pl.pallas_call(
        decoder_kernel,
        out_shape=jax.ShapeDtypeStruct((out_dim, Bp), out_dtype),
        grid=(n_tiles,),
        in_specs=[
            batch_spec(latent_dim),                     # z^T
            full_spec(params["w1"].shape), full_spec(v1.shape),
            full_spec(params["w2"].shape), full_spec(v2.shape),
            full_spec(params["wo"].shape), full_spec(bo.shape),
        ],
        out_specs=batch_spec(out_dim),
        compiler_params=pltpu.CompilerParams(
            dimension_semantics=("parallel",)),
    )(zt, params["w1"], v1, params["w2"], v2, params["wo"], bo)

    return out_t[:, :B].T                               # (B, out_dim)


def init_params(key, latent_dim, decoder_layers, output_dim):
    """Deterministic synthetic parameters in PyTorch nn.Linear layout ([out, in])."""
    assert len(decoder_layers) == 2, "this kernel is specialized to 2 hidden layers"
    h1, h2 = decoder_layers
    keys = jax.random.split(key, 6)
    scale = 0.1
    return {
        "w1": scale * jax.random.normal(keys[0], (h1, latent_dim), jnp.float32),
        "b1": scale * jax.random.normal(keys[1], (h1,), jnp.float32),
        "g1": jnp.ones((h1,), jnp.float32),
        "be1": jnp.zeros((h1,), jnp.float32),
        "w2": scale * jax.random.normal(keys[2], (h2, h1), jnp.float32),
        "b2": scale * jax.random.normal(keys[3], (h2,), jnp.float32),
        "g2": jnp.ones((h2,), jnp.float32),
        "be2": jnp.zeros((h2,), jnp.float32),
        "wo": scale * jax.random.normal(keys[4], (output_dim, h2), jnp.float32),
        "bo": scale * jax.random.normal(keys[5], (output_dim,), jnp.float32),
    }


def decoder_reference(z, params):
    """Pure-JAX reference mirroring the PyTorch forward (eval mode, LayerNorm)."""
    def ln(x, g, b):
        mu = jnp.mean(x, axis=-1, keepdims=True)
        var = jnp.mean((x - mu) * (x - mu), axis=-1, keepdims=True)
        return (x - mu) * lax.rsqrt(var + LN_EPS) * g + b

    h = z @ params["w1"].T + params["b1"]
    h = _leaky_relu(h)
    h = ln(h, params["g1"], params["be1"])
    h = h @ params["w2"].T + params["b2"]
    h = _leaky_relu(h)
    h = ln(h, params["g2"], params["be2"])
    return h @ params["wo"].T + params["bo"]


if __name__ == "__main__":
    latent_dim = 8
    decoder_layers = [32, 32]
    output_dim = 16
    batch = 16

    key = jax.random.PRNGKey(0)
    k_z, k_p, k_z2 = jax.random.split(key, 3)
    z = jax.random.normal(k_z, (batch, latent_dim), jnp.float32)
    params = init_params(k_p, latent_dim, decoder_layers, output_dim)

    # TODO(synk): BatchNorm1d branch (use_batchnorm=True) and train-mode Dropout
    # are not implemented; this kernel reproduces LayerNorm + eval-mode forward.
    # TODO(synk): for tiny, grid=1 batches the launch/DMA-prime cost dominates;
    # the real win there is fusing this decoder into the kernel producing z.

    # Small batch: single lane-aligned tile, grid=(1,).
    out = jax.block_until_ready(decoder_forward(z, params))
    ref = decoder_reference(z, params)
    assert out.shape == (batch, output_dim)
    assert jnp.allclose(out, ref, atol=1e-4, rtol=1e-4)

    # Ragged batch exercising zero-padding + a multi-step grid (block_b forced small).
    z2 = jax.random.normal(k_z2, (300, latent_dim), jnp.float32)
    out2 = jax.block_until_ready(decoder_forward(z2, params, max_block_b=128))
    ref2 = decoder_reference(z2, params)
    assert out2.shape == (300, output_dim)
    assert jnp.allclose(out2, ref2, atol=1e-4, rtol=1e-4)

    # Optional reduced-precision output path (halves HBM writeback).
    out3 = jax.block_until_ready(decoder_forward(z, params, out_dtype=jnp.bfloat16))
    assert out3.shape == (batch, output_dim) and out3.dtype == jnp.bfloat16
    assert jnp.allclose(out3.astype(jnp.float32), ref, atol=5e-2, rtol=5e-2)

    print("KERNEL_OK")
</pallas_src>

<mosaic_0001>
module attributes {stable_mosaic.version = 11 : i64} {
  func.func @decoder_kernel(%arg0: i32, %arg1: memref<8x128xf32, #tpu.memory_space<vmem>>, %arg2: memref<32x8xf32, #tpu.memory_space<vmem>>, %arg3: memref<32x3xf32, #tpu.memory_space<vmem>>, %arg4: memref<32x32xf32, #tpu.memory_space<vmem>>, %arg5: memref<32x3xf32, #tpu.memory_space<vmem>>, %arg6: memref<16x32xf32, #tpu.memory_space<vmem>>, %arg7: memref<16x1xf32, #tpu.memory_space<vmem>>, %arg8: memref<16x128xf32, #tpu.memory_space<vmem>>) attributes {dimension_semantics = [#tpu.dimension_semantics<parallel>], iteration_bounds = array<i64: 1>, scalar_prefetch = 0 : i64, scratch_operands = 0 : i64, tpu.core_type = #tpu.core_type<tc>, window_params = [{transform_indices = @transform_0, window_bounds = array<i64: 8, 128>}, {pipeline_mode = #tpu.pipeline_mode<synchronous>, transform_indices = @transform_1, window_bounds = array<i64: 32, 8>}, {pipeline_mode = #tpu.pipeline_mode<synchronous>, transform_indices = @transform_2, window_bounds = array<i64: 32, 3>}, {pipeline_mode = #tpu.pipeline_mode<synchronous>, transform_indices = @transform_3, window_bounds = array<i64: 32, 32>}, {pipeline_mode = #tpu.pipeline_mode<synchronous>, transform_indices = @transform_4, window_bounds = array<i64: 32, 3>}, {pipeline_mode = #tpu.pipeline_mode<synchronous>, transform_indices = @transform_5, window_bounds = array<i64: 16, 32>}, {pipeline_mode = #tpu.pipeline_mode<synchronous>, transform_indices = @transform_6, window_bounds = array<i64: 16, 1>}, {transform_indices = @transform_7, window_bounds = array<i64: 16, 128>}]} {
    %c0 = arith.constant 0 : index
    %c0_0 = arith.constant 0 : index
    %0 = vector.load %arg1[%c0, %c0_0] : memref<8x128xf32, #tpu.memory_space<vmem>>, vector<8x128xf32>
    %c0_1 = arith.constant 0 : index
    %c0_2 = arith.constant 0 : index
    %1 = vector.load %arg2[%c0_1, %c0_2] : memref<32x8xf32, #tpu.memory_space<vmem>>, vector<32x8xf32>
    %cst = arith.constant dense<0.000000e+00> : vector<32x128xf32>
    %2 = tpu.matmul %1, %0, %cst {dimension_numbers = #tpu.dot_dimension_numbers<[1], [0], [0], [1], [0, 0, 1, 1], [], []>} : vector<32x8xf32>, vector<8x128xf32>, vector<32x128xf32> -> vector<32x128xf32>
    %c0_3 = arith.constant 0 : index
    %c0_4 = arith.constant 0 : index
    %3 = vector.load %arg3[%c0_3, %c0_4] : memref<32x3xf32, #tpu.memory_space<vmem>>, vector<32x1xf32>
    %4 = vector.broadcast %3 : vector<32x1xf32> to vector<32x128xf32>
    %5 = arith.addf %2, %4 : vector<32x128xf32>
    %cst_5 = arith.constant 0.000000e+00 : f32
    %6 = vector.broadcast %cst_5 : f32 to vector<32x128xf32>
    %7 = arith.cmpf ogt, %5, %6 : vector<32x128xf32>
    %cst_6 = arith.constant 0.00999999977 : f32
    %8 = vector.broadcast %cst_6 : f32 to vector<32x128xf32>
    %9 = arith.mulf %8, %5 : vector<32x128xf32>
    %10 = arith.select %7, %5, %9 : vector<32x128xi1>, vector<32x128xf32>
    %c0_7 = arith.constant 0 : index
    %c1 = arith.constant 1 : index
    %11 = vector.load %arg3[%c0_7, %c1] : memref<32x3xf32, #tpu.memory_space<vmem>>, vector<32x1xf32>
    %c0_8 = arith.constant 0 : index
    %c2 = arith.constant 2 : index
    %12 = vector.load %arg3[%c0_8, %c2] : memref<32x3xf32, #tpu.memory_space<vmem>>, vector<32x1xf32>
    %cst_9 = arith.constant dense<0.000000e+00> : vector<128xf32>
    %13 = vector.multi_reduction <add>, %10, %cst_9 [0] : vector<32x128xf32> to vector<128xf32>
    %14 = vector.shape_cast %13 : vector<128xf32> to vector<1x128xf32>
    %cst_10 = arith.constant 3.200000e+01 : f32
    %15 = vector.broadcast %cst_10 : f32 to vector<1x128xf32>
    %16 = arith.divf %14, %15 : vector<1x128xf32>
    %17 = arith.mulf %10, %10 : vector<32x128xf32>
    %cst_11 = arith.constant dense<0.000000e+00> : vector<128xf32>
    %18 = vector.multi_reduction <add>, %17, %cst_11 [0] : vector<32x128xf32> to vector<128xf32>
    %19 = vector.shape_cast %18 : vector<128xf32> to vector<1x128xf32>
    %cst_12 = arith.constant 3.200000e+01 : f32
    %20 = vector.broadcast %cst_12 : f32 to vector<1x128xf32>
    %21 = arith.divf %19, %20 : vector<1x128xf32>
    %22 = arith.mulf %16, %16 : vector<1x128xf32>
    %23 = arith.subf %21, %22 : vector<1x128xf32>
    %24 = vector.broadcast %16 : vector<1x128xf32> to vector<32x128xf32>
    %25 = arith.subf %10, %24 : vector<32x128xf32>
    %cst_13 = arith.constant 9.99999974E-6 : f32
    %26 = vector.broadcast %cst_13 : f32 to vector<1x128xf32>
    %27 = arith.addf %23, %26 : vector<1x128xf32>
    %28 = math.rsqrt %27 : vector<1x128xf32>
    %29 = vector.broadcast %28 : vector<1x128xf32> to vector<32x128xf32>
    %30 = arith.mulf %25, %29 : vector<32x128xf32>
    %31 = vector.broadcast %11 : vector<32x1xf32> to vector<32x128xf32>
    %32 = arith.mulf %30, %31 : vector<32x128xf32>
    %33 = vector.broadcast %12 : vector<32x1xf32> to vector<32x128xf32>
    %34 = arith.addf %32, %33 : vector<32x128xf32>
    %c0_14 = arith.constant 0 : index
    %c0_15 = arith.constant 0 : index
    %35 = vector.load %arg4[%c0_14, %c0_15] : memref<32x32xf32, #tpu.memory_space<vmem>>, vector<32x32xf32>
    %cst_16 = arith.constant dense<0.000000e+00> : vector<32x128xf32>
    %36 = tpu.matmul %35, %34, %cst_16 {dimension_numbers = #tpu.dot_dimension_numbers<[1], [0], [0], [1], [0, 0, 1, 1], [], []>} : vector<32x32xf32>, vector<32x128xf32>, vector<32x128xf32> -> vector<32x128xf32>
    %c0_17 = arith.constant 0 : index
    %c0_18 = arith.constant 0 : index
    %37 = vector.load %arg5[%c0_17, %c0_18] : memref<32x3xf32, #tpu.memory_space<vmem>>, vector<32x1xf32>
    %38 = vector.broadcast %37 : vector<32x1xf32> to vector<32x128xf32>
    %39 = arith.addf %36, %38 : vector<32x128xf32>
    %cst_19 = arith.constant 0.000000e+00 : f32
    %40 = vector.broadcast %cst_19 : f32 to vector<32x128xf32>
    %41 = arith.cmpf ogt, %39, %40 : vector<32x128xf32>
    %cst_20 = arith.constant 0.00999999977 : f32
    %42 = vector.broadcast %cst_20 : f32 to vector<32x128xf32>
    %43 = arith.mulf %42, %39 : vector<32x128xf32>
    %44 = arith.select %41, %39, %43 : vector<32x128xi1>, vector<32x128xf32>
    %c0_21 = arith.constant 0 : index
    %c1_22 = arith.constant 1 : index
    %45 = vector.load %arg5[%c0_21, %c1_22] : memref<32x3xf32, #tpu.memory_space<vmem>>, vector<32x1xf32>
    %c0_23 = arith.constant 0 : index
    %c2_24 = arith.constant 2 : index
    %46 = vector.load %arg5[%c0_23, %c2_24] : memref<32x3xf32, #tpu.memory_space<vmem>>, vector<32x1xf32>
    %cst_25 = arith.constant dense<0.000000e+00> : vector<128xf32>
    %47 = vector.multi_reduction <add>, %44, %cst_25 [0] : vector<32x128xf32> to vector<128xf32>
    %48 = vector.shape_cast %47 : vector<128xf32> to vector<1x128xf32>
    %cst_26 = arith.constant 3.200000e+01 : f32
    %49 = vector.broadcast %cst_26 : f32 to vector<1x128xf32>
    %50 = arith.divf %48, %49 : vector<1x128xf32>
    %51 = arith.mulf %44, %44 : vector<32x128xf32>
    %cst_27 = arith.constant dense<0.000000e+00> : vector<128xf32>
    %52 = vector.multi_reduction <add>, %51, %cst_27 [0] : vector<32x128xf32> to vector<128xf32>
    %53 = vector.shape_cast %52 : vector<128xf32> to vector<1x128xf32>
    %cst_28 = arith.constant 3.200000e+01 : f32
    %54 = vector.broadcast %cst_28 : f32 to vector<1x128xf32>
    %55 = arith.divf %53, %54 : vector<1x128xf32>
    %56 = arith.mulf %50, %50 : vector<1x128xf32>
    %57 = arith.subf %55, %56 : vector<1x128xf32>
    %58 = vector.broadcast %50 : vector<1x128xf32> to vector<32x128xf32>
    %59 = arith.subf %44, %58 : vector<32x128xf32>
    %cst_29 = arith.constant 9.99999974E-6 : f32
    %60 = vector.broadcast %cst_29 : f32 to vector<1x128xf32>
    %61 = arith.addf %57, %60 : vector<1x128xf32>
    %62 = math.rsqrt %61 : vector<1x128xf32>
    %63 = vector.broadcast %62 : vector<1x128xf32> to vector<32x128xf32>
    %64 = arith.mulf %59, %63 : vector<32x128xf32>
    %65 = vector.broadcast %45 : vector<32x1xf32> to vector<32x128xf32>
    %66 = arith.mulf %64, %65 : vector<32x128xf32>
    %67 = vector.broadcast %46 : vector<32x1xf32> to vector<32x128xf32>
    %68 = arith.addf %66, %67 : vector<32x128xf32>
    %c0_30 = arith.constant 0 : index
    %c0_31 = arith.constant 0 : index
    %69 = vector.load %arg6[%c0_30, %c0_31] : memref<16x32xf32, #tpu.memory_space<vmem>>, vector<16x32xf32>
    %cst_32 = arith.constant dense<0.000000e+00> : vector<16x128xf32>
    %70 = tpu.matmul %69, %68, %cst_32 {dimension_numbers = #tpu.dot_dimension_numbers<[1], [0], [0], [1], [0, 0, 1, 1], [], []>} : vector<16x32xf32>, vector<32x128xf32>, vector<16x128xf32> -> vector<16x128xf32>
    %c0_33 = arith.constant 0 : index
    %c0_34 = arith.constant 0 : index
    %71 = vector.load %arg7[%c0_33, %c0_34] : memref<16x1xf32, #tpu.memory_space<vmem>>, vector<16x1xf32>
    %72 = vector.broadcast %71 : vector<16x1xf32> to vector<16x128xf32>
    %73 = arith.addf %70, %72 : vector<16x128xf32>
    %c0_35 = arith.constant 0 : index
    %c0_36 = arith.constant 0 : index
    %74 = vector.load %arg8[%c0_35, %c0_36] : memref<16x128xf32, #tpu.memory_space<vmem>>, vector<16x128xf32>
    tpu.vector_store %arg8[%c0_35, %c0_36], %73 {strides = array<i32>} : memref<16x128xf32, #tpu.memory_space<vmem>>, vector<16x128xf32>,
    return
  }
  func.func @transform_0(%arg0: i32) -> (i32, i32) {
    %c0_i32 = arith.constant 0 : i32
    %c0_i32_0 = arith.constant 0 : i32
    return %c0_i32, %arg0 : i32, i32
  }
  func.func @transform_1(%arg0: i32) -> (i32, i32) {
    %c0_i32 = arith.constant 0 : i32
    %c0_i32_0 = arith.constant 0 : i32
    %c0_i32_1 = arith.constant 0 : i32
    return %c0_i32, %c0_i32_0 : i32, i32
  }
  func.func @transform_2(%arg0: i32) -> (i32, i32) {
    %c0_i32 = arith.constant 0 : i32
    %c0_i32_0 = arith.constant 0 : i32
    %c0_i32_1 = arith.constant 0 : i32
    return %c0_i32, %c0_i32_0 : i32, i32
  }
  func.func @transform_3(%arg0: i32) -> (i32, i32) {
    %c0_i32 = arith.constant 0 : i32
    %c0_i32_0 = arith.constant 0 : i32
    %c0_i32_1 = arith.constant 0 : i32
    return %c0_i32, %c0_i32_0 : i32, i32
  }
  func.func @transform_4(%arg0: i32) -> (i32, i32) {
    %c0_i32 = arith.constant 0 : i32
    %c0_i32_0 = arith.constant 0 : i32
    %c0_i32_1 = arith.constant 0 : i32
    return %c0_i32, %c0_i32_0 : i32, i32
  }
  func.func @transform_5(%arg0: i32) -> (i32, i32) {
    %c0_i32 = arith.constant 0 : i32
    %c0_i32_0 = arith.constant 0 : i32
    %c0_i32_1 = arith.constant 0 : i32
    return %c0_i32, %c0_i32_0 : i32, i32
  }
  func.func @transform_6(%arg0: i32) -> (i32, i32) {
    %c0_i32 = arith.constant 0 : i32
    %c0_i32_0 = arith.constant 0 : i32
    %c0_i32_1 = arith.constant 0 : i32
    return %c0_i32, %c0_i32_0 : i32, i32
  }
  func.func @transform_7(%arg0: i32) -> (i32, i32) {
    %c0_i32 = arith.constant 0 : i32
    %c0_i32_0 = arith.constant 0 : i32
    return %c0_i32, %arg0 : i32, i32
  }
}

</mosaic_0001>

<llo_original>
// kernel: tpu_custom_call.1
$region0: #{tpu_custom_call.1}
  #allocation0 [shape = 'u32[]', space=smem, size = 0x4, offset = 0x4, fixed_abs, tag = 'smem constant byte address 0x4 - core index']
  #allocation1 [shape = 'u32[144,128]{1,0:T(1,128)}', space=vmem, size = 0x12000, scoped, tag = 'internal scratch']
  %s0 = inlined_call_operand.vmem [shape: f32[8,128], index: 0, kind: input, shape index: {}]
  %s1 = inlined_call_operand.vmem [shape: f32[32,8], index: 1, kind: input, shape index: {}]
  %s2 = inlined_call_operand.vmem [shape: f32[32,3], index: 2, kind: input, shape index: {}]
  %s3 = inlined_call_operand.vmem [shape: f32[32,32], index: 3, kind: input, shape index: {}]
  %s4 = inlined_call_operand.vmem [shape: f32[32,3], index: 4, kind: input, shape index: {}]
  %s5 = inlined_call_operand.vmem [shape: f32[16,32], index: 5, kind: input, shape index: {}]
  %s6 = inlined_call_operand.vmem [shape: f32[16,1], index: 6, kind: input, shape index: {}]
  %s7 = inlined_call_operand.hbm [shape: f32[16,128], index: 7, kind: output, shape index: {}]
  %s8 = sld [smem:[#allocation0]]
  $region38: #{tpu_custom_call.1} parent=0
    _
  %s10 = ssub.s32 1, %s8
  %s11 = scalar_select 0, %s10, %s8
  $region1: #{tpu_custom_call.1} parent=0
    #allocation2 [shape = 'u8[8192]{0}', space=vmem, size = 0x2000, scoped, tag = 'output window, operand 0, single buffered']
    #allocation3 [shape = 's32[1]{0}', space=sflag, size = 0x4, scoped, tag = 'scoped memory for tpu_custom_call.1']
    %12 = vsyncpa [#allocation3], 0
    // Predicated region
    $region2: #{tpu_custom_call.1} parent=1 // pred_check
      _
    $region3: #{tpu_custom_call.1} parent=1 // pred_check_branch
      %14 = sbr.rel (0) target = $region5
    $region4: #{tpu_custom_call.1} parent=1 // pred_region
      _
    $region5: #{tpu_custom_call.1} parent=1 // pred_fallthru
      _
    // Predicated region
    $region6: #{tpu_custom_call.1} parent=1 // pred_check
      _
    $region7: #{tpu_custom_call.1} parent=1 // pred_check_branch
      %16 = sbr.rel (0) target = $region9
    $region8: #{tpu_custom_call.1} parent=1 // pred_region
      _
    $region9: #{tpu_custom_call.1} parent=1 // pred_fallthru
      _
    // Predicated region
    $region10: #{tpu_custom_call.1} parent=1 // pred_check
      _
    $region11: #{tpu_custom_call.1} parent=1 // pred_check_branch
      %18 = sbr.rel (0) target = $region13
    $region12: #{tpu_custom_call.1} parent=1 // pred_region
      _
    $region13: #{tpu_custom_call.1} parent=1 // pred_fallthru
      _
    // Predicated region
    $region14: #{tpu_custom_call.1} parent=1 // pred_check
      _
    $region15: #{tpu_custom_call.1} parent=1 // pred_check_branch
      %20 = sbr.rel (0) target = $region17
    $region16: #{tpu_custom_call.1} parent=1 // pred_region
      _
    $region17: #{tpu_custom_call.1} parent=1 // pred_fallthru
      _
    // Predicated region
    $region18: #{tpu_custom_call.1} parent=1 // pred_check
      _
    $region19: #{tpu_custom_call.1} parent=1 // pred_check_branch
      %22 = sbr.rel (0) target = $region21
    $region20: #{tpu_custom_call.1} parent=1 // pred_region
      _
    $region21: #{tpu_custom_call.1} parent=1 // pred_fallthru
      _
    // Predicated region
    $region22: #{tpu_custom_call.1} parent=1 // pred_check
      _
    $region23: #{tpu_custom_call.1} parent=1 // pred_check_branch
      %24 = sbr.rel (0) target = $region25
    $region24: #{tpu_custom_call.1} parent=1 // pred_region
      _
    $region25: #{tpu_custom_call.1} parent=1 // pred_fallthru
      _
    // Predicated region
    $region26: #{tpu_custom_call.1} parent=1 // pred_check
      _
    $region27: #{tpu_custom_call.1} parent=1 // pred_check_branch
      %26 = sbr.rel (0) target = $region29
    $region28: #{tpu_custom_call.1} parent=1 // pred_region
      _
    $region29: #{tpu_custom_call.1} parent=1 // pred_fallthru
      _
    %v27 = vld [vmem:[%s0] sm:$0xff]
    %v28 = vld [vmem:[%s1] sm:$0xff]
    %v29 = vld [vmem:[%s1 + $0x8] sm:$0xff]
    %v30 = vld [vmem:[%s1 + $0x10] sm:$0xff]
    %v31 = vld [vmem:[%s1 + $0x18] sm:$0xff]
    %v32 = vld [vmem:[%s2] sm:$0xff]
    %v33 = vld [vmem:[%s2 + $0x8] sm:$0xff]
    %v34 = vld [vmem:[%s2 + $0x10] sm:$0xff]
    %v35 = vld [vmem:[%s2 + $0x18] sm:$0xff]
    %37 = vset.pattern.permute.xlu0 0
    %38 = vperm.xlu0 %37, %v32
    %v39 = vpop.permute.xlu0 %38
    %42 = vset.pattern.permute.xlu0 0
    %43 = vperm.xlu0 %42, %v33
    %v44 = vpop.permute.xlu0 %43
    %47 = vset.pattern.permute.xlu0 0
    %48 = vperm.xlu0 %47, %v34
    %v49 = vpop.permute.xlu0 %48
    %52 = vset.pattern.permute.xlu0 0
    %53 = vperm.xlu0 %52, %v35
    %v54 = vpop.permute.xlu0 %53
    %vm56 = vcmask 64512
    %v58 = vsel %vm56, %v28, 0
    %v61 = vsel %vm56, %v29, 0
    %v64 = vsel %vm56, %v30, 0
    %v67 = vsel %vm56, %v31, 0
    %69 = vmatprep.subr.mxu0 0.0
    %70 = vmatpush1.msra.mxu0 0.0
    %71 = vmatprep.subr.mxu0 0.0
    %72 = vmatpush1.msra.mxu0 0.0
    %73 = vmatprep.subr.mxu0 0.0
    %74 = vmatpush1.msra.mxu0 0.0
    %75 = vmatprep.subr.mxu0 0.0
    %76 = vmatpush1.msra.mxu0 0.0
    %77 = vmatprep.subr.mxu0 0.0
    %78 = vmatpush1.msra.mxu0 0.0
    %79 = vmatprep.subr.mxu0 0.0
    %80 = vmatpush1.msra.mxu0 0.0
    %81 = vmatprep.subr.mxu0 0.0
    %82 = vmatpush1.msra.mxu0 0.0
    %83 = vmatprep.subr.mxu0 0.0
    %84 = vmatpush1.msra.mxu0 0.0
    %85 = vmatprep.subr.mxu0 0.0
    %86 = vmatpush1.msra.mxu0 0.0
    %87 = vmatprep.subr.mxu0 0.0
    %88 = vmatpush1.msra.mxu0 0.0
    %89 = vmatprep.subr.mxu0 0.0
    %90 = vmatpush1.msra.mxu0 0.0
    %91 = vmatprep.subr.mxu0 0.0
    %92 = vmatpush1.msra.mxu0 0.0
    %93 = vmatprep.subr.mxu0 0.0
    %94 = vmatpush1.msra.mxu0 0.0
    %95 = vmatprep.subr.mxu0 0.0
    %96 = vmatpush1.msra.mxu0 0.0
    %97 = vmatprep.subr.mxu0 0.0
    %98 = vmatpush1.msra.mxu0 0.0
    %99 = vmatprep.subr.mxu0 0.0
    %100 = vmatpush1.msra.mxu0 %v27
    %101 = vmatprep.subr.mxu0 0.0
    %102 = vmatpush2.msra.mxu0 0.0
    %103 = vmatprep.subr.mxu0 0.0
    %104 = vmatpush2.msra.mxu0 0.0
    %105 = vmatprep.subr.mxu0 0.0
    %106 = vmatpush2.msra.mxu0 0.0
    %107 = vmatprep.subr.mxu0 0.0
    %108 = vmatpush2.msra.mxu0 0.0
    %109 = vmatprep.subr.mxu0 0.0
    %110 = vmatpush2.msra.mxu0 0.0
    %111 = vmatprep.subr.mxu0 0.0
    %112 = vmatpush2.msra.mxu0 0.0
    %113 = vmatprep.subr.mxu0 0.0
    %114 = vmatpush2.msra.mxu0 0.0
    %115 = vmatprep.subr.mxu0 0.0
    %116 = vmatpush2.msra.mxu0 0.0
    %117 = vmatprep.subr.mxu0 0.0
    %118 = vmatpush2.msra.mxu0 0.0
    %119 = vmatprep.subr.mxu0 0.0
    %120 = vmatpush2.msra.mxu0 0.0
    %121 = vmatprep.subr.mxu0 0.0
    %122 = vmatpush2.msra.mxu0 0.0
    %123 = vmatprep.subr.mxu0 0.0
    %124 = vmatpush2.msra.mxu0 0.0
    %125 = vmatprep.subr.mxu0 0.0
    %126 = vmatpush2.msra.mxu0 0.0
    %127 = vmatprep.subr.mxu0 0.0
    %128 = vmatpush2.msra.mxu0 0.0
    %129 = vmatprep.subr.mxu0 0.0
    %130 = vmatpush2.msra.mxu0 0.0
    %131 = vmatprep.subr.mxu0 0.0
    %132 = vmatpush2.msra.mxu0 0.0
    %133 = vmatprep.mubr.f32.mxu0 0.0
    %134 = vmatmul.mubr.f32.gmra.mxu0 %v58
    %v135 = vpop.f32.mrf.mxu0
    %v136 = vadd.f32 %v39, %v135
    %v137 = vpop.f32.mrf.mxu0
    %138 = vmatprep.mubr.f32.mxu0 0.0
    %139 = vmatmul.mubr.f32.gmra.mxu0 %v61
    %v140 = vpop.f32.mrf.mxu0
    %v141 = vadd.f32 %v44, %v140
    %v142 = vpop.f32.mrf.mxu0
    %143 = vmatprep.mubr.f32.mxu0 0.0
    %144 = vmatmul.mubr.f32.gmra.mxu0 %v64
    %v145 = vpop.f32.mrf.mxu0
    %v146 = vadd.f32 %v49, %v145
    %v147 = vpop.f32.mrf.mxu0
    %148 = vmatprep.mubr.f32.mxu0 0.0
    %149 = vmatmul.mubr.f32.gmra.mxu0 %v67
    %v150 = vpop.f32.mrf.mxu0
    %v151 = vadd.f32 %v54, %v150
    %v152 = vpop.f32.mrf.mxu0
    %153 = vdwg.mxu0
    %vm154 = vcmp.gt.f32.partialorder %v136, 0.0
    %vm155 = vcmp.gt.f32.partialorder %v141, 0.0
    %vm156 = vcmp.gt.f32.partialorder %v146, 0.0
    %vm157 = vcmp.gt.f32.partialorder %v151, 0.0
    %v158 = vmul.f32 %v136, 0.01
    %v159 = vmul.f32 %v141, 0.01
    %v160 = vmul.f32 %v146, 0.01
    %v161 = vmul.f32 %v151, 0.01
    %v162 = vsel %vm154, %v136, %v158
    %v163 = vsel %vm155, %v141, %v159
    %v164 = vsel %vm156, %v146, %v160
    %v165 = vsel %vm157, %v151, %v161
    %v166 = vadd.f32 %v162, %v163
    %v167 = vadd.f32 %v166, %v164
    %v168 = vadd.f32 %v167, %v165
    %v169 = vrot.slane %v168, 4
    %v170 = vadd.f32 %v168, %v169
    %v171 = vrot.slane %v170, 2
    %v172 = vadd.f32 %v170, %v171
    %v173 = vrot.slane %v172, 1
    %v174 = vadd.f32 %v172, %v173
    %v175 = vrcp.pop 32.0
    %v176 = vmul.f32 %v174, %v175
    %v177 = vmul.f32 %v162, %v162
    %v178 = vmul.f32 %v163, %v163
    %v179 = vmul.f32 %v164, %v164
    %v180 = vmul.f32 %v165, %v165
    %v181 = vadd.f32 %v177, %v178
    %v182 = vadd.f32 %v181, %v179
    %v183 = vadd.f32 %v182, %v180
    %v184 = vrot.slane %v183, 4
    %v185 = vadd.f32 %v183, %v184
    %v186 = vrot.slane %v185, 2
    %v187 = vadd.f32 %v185, %v186
    %v188 = vrot.slane %v187, 1
    %v189 = vadd.f32 %v187, %v188
    %v190 = vmul.f32 %v189, %v175
    %v191 = vmul.f32 %v176, %v176
    %v192 = vsub.f32 %v190, %v191
    %v193 = vsub.f32 %v162, %v176
    %v194 = vsub.f32 %v163, %v176
    %v195 = vsub.f32 %v164, %v176
    %v196 = vsub.f32 %v165, %v176
    %v197 = vadd.f32 %v192, 1e-05
    %v198 = vrsqrt.pop %v197
    %v199 = vmul.f32 %v193, %v198
    %v200 = vmul.f32 %v194, %v198
    %v201 = vmul.f32 %v195, %v198
    %v202 = vmul.f32 %v196, %v198
    %203 = vset.pattern.permute.xlu0 1
    %204 = vperm.xlu0 %203, %v32
    %v205 = vpop.permute.xlu0 %204
    %207 = vset.pattern.permute.xlu0 1
    %208 = vperm.xlu0 %207, %v33
    %v209 = vpop.permute.xlu0 %208
    %211 = vset.pattern.permute.xlu0 1
    %212 = vperm.xlu0 %211, %v34
    %v213 = vpop.permute.xlu0 %212
    %215 = vset.pattern.permute.xlu0 1
    %216 = vperm.xlu0 %215, %v35
    %v217 = vpop.permute.xlu0 %216
    %v219 = vmul.f32 %v199, %v205
    %v220 = vmul.f32 %v200, %v209
    %v221 = vmul.f32 %v201, %v213
    %v222 = vmul.f32 %v202, %v217
    %223 = vset.pattern.permute.xlu0 2
    %224 = vperm.xlu0 %223, %v32
    %v225 = vpop.permute.xlu0 %224
    %227 = vset.pattern.permute.xlu0 2
    %228 = vperm.xlu0 %227, %v33
    %v229 = vpop.permute.xlu0 %228
    %231 = vset.pattern.permute.xlu0 2
    %232 = vperm.xlu0 %231, %v34
    %v233 = vpop.permute.xlu0 %232
    %235 = vset.pattern.permute.xlu0 2
    %236 = vperm.xlu0 %235, %v35
    %v237 = vpop.permute.xlu0 %236
    %v239 = vadd.f32 %v219, %v225
    %v240 = vadd.f32 %v220, %v229
    %v241 = vadd.f32 %v221, %v233
    %v242 = vadd.f32 %v222, %v237
    %v243 = vld [vmem:[%s3] sm:$0xff]
    %v244 = vld [vmem:[%s3 + $0x8] sm:$0xff]
    %v245 = vld [vmem:[%s3 + $0x10] sm:$0xff]
    %v246 = vld [vmem:[%s3 + $0x18] sm:$0xff]
    %v247 = vld [vmem:[%s4] sm:$0xff]
    %v248 = vld [vmem:[%s4 + $0x8] sm:$0xff]
    %v249 = vld [vmem:[%s4 + $0x10] sm:$0xff]
    %v250 = vld [vmem:[%s4 + $0x18] sm:$0xff]
    %252 = vset.pattern.permute.xlu0 0
    %253 = vperm.xlu0 %252, %v247
    %v254 = vpop.permute.xlu0 %253
    %257 = vset.pattern.permute.xlu0 0
    %258 = vperm.xlu0 %257, %v248
    %v259 = vpop.permute.xlu0 %258
    %262 = vset.pattern.permute.xlu0 0
    %263 = vperm.xlu0 %262, %v249
    %v264 = vpop.permute.xlu0 %263
    %267 = vset.pattern.permute.xlu0 0
    %268 = vperm.xlu0 %267, %v250
    %v269 = vpop.permute.xlu0 %268
    %vm271 = vcmask 261120
    %v273 = vsel %vm271, %v243, 0
    %v276 = vsel %vm271, %v244, 0
    %v279 = vsel %vm271, %v245, 0
    %v282 = vsel %vm271, %v246, 0
    %284 = vmatprep.subr.mxu0 0.0
    %285 = vmatpush1.msra.mxu0 0.0
    %286 = vmatprep.subr.mxu0 0.0
    %287 = vmatpush1.msra.mxu0 0.0
    %288 = vmatprep.subr.mxu0 0.0
    %289 = vmatpush1.msra.mxu0 0.0
    %290 = vmatprep.subr.mxu0 0.0
    %291 = vmatpush1.msra.mxu0 0.0
    %292 = vmatprep.subr.mxu0 0.0
    %293 = vmatpush1.msra.mxu0 0.0
    %294 = vmatprep.subr.mxu0 0.0
    %295 = vmatpush1.msra.mxu0 0.0
    %296 = vmatprep.subr.mxu0 0.0
    %297 = vmatpush1.msra.mxu0 0.0
    %298 = vmatprep.subr.mxu0 0.0
    %299 = vmatpush1.msra.mxu0 0.0
    %300 = vmatprep.subr.mxu0 0.0
    %301 = vmatpush1.msra.mxu0 0.0
    %302 = vmatprep.subr.mxu0 0.0
    %303 = vmatpush1.msra.mxu0 0.0
    %304 = vmatprep.subr.mxu0 0.0
    %305 = vmatpush1.msra.mxu0 0.0
    %306 = vmatprep.subr.mxu0 0.0
    %307 = vmatpush1.msra.mxu0 0.0
    %308 = vmatprep.subr.mxu0 0.0
    %309 = vmatpush1.msra.mxu0 %v242
    %310 = vmatprep.subr.mxu0 0.0
    %311 = vmatpush1.msra.mxu0 %v241
    %312 = vmatprep.subr.mxu0 0.0
    %313 = vmatpush1.msra.mxu0 %v240
    %314 = vmatprep.subr.mxu0 0.0
    %315 = vmatpush1.msra.mxu0 %v239
    %316 = vmatprep.subr.mxu0 0.0
    %317 = vmatpush2.msra.mxu0 0.0
    %318 = vmatprep.subr.mxu0 0.0
    %319 = vmatpush2.msra.mxu0 0.0
    %320 = vmatprep.subr.mxu0 0.0
    %321 = vmatpush2.msra.mxu0 0.0
    %322 = vmatprep.subr.mxu0 0.0
    %323 = vmatpush2.msra.mxu0 0.0
    %324 = vmatprep.subr.mxu0 0.0
    %325 = vmatpush2.msra.mxu0 0.0
    %326 = vmatprep.subr.mxu0 0.0
    %327 = vmatpush2.msra.mxu0 0.0
    %328 = vmatprep.subr.mxu0 0.0
    %329 = vmatpush2.msra.mxu0 0.0
    %330 = vmatprep.subr.mxu0 0.0
    %331 = vmatpush2.msra.mxu0 0.0
    %332 = vmatprep.subr.mxu0 0.0
    %333 = vmatpush2.msra.mxu0 0.0
    %334 = vmatprep.subr.mxu0 0.0
    %335 = vmatpush2.msra.mxu0 0.0
    %336 = vmatprep.subr.mxu0 0.0
    %337 = vmatpush2.msra.mxu0 0.0
    %338 = vmatprep.subr.mxu0 0.0
    %339 = vmatpush2.msra.mxu0 0.0
    %340 = vmatprep.subr.mxu0 0.0
    %341 = vmatpush2.msra.mxu0 0.0
    %342 = vmatprep.subr.mxu0 0.0
    %343 = vmatpush2.msra.mxu0 0.0
    %344 = vmatprep.subr.mxu0 0.0
    %345 = vmatpush2.msra.mxu0 0.0
    %346 = vmatprep.subr.mxu0 0.0
    %347 = vmatpush2.msra.mxu0 0.0
    %348 = vmatprep.mubr.f32.mxu0 0.0
    %349 = vmatmul.mubr.f32.gmra.mxu0 %v273
    %v350 = vpop.f32.mrf.mxu0
    %v351 = vadd.f32 %v254, %v350
    %v352 = vpop.f32.mrf.mxu0
    %353 = vmatprep.mubr.f32.mxu0 0.0
    %354 = vmatmul.mubr.f32.gmra.mxu0 %v276
    %v355 = vpop.f32.mrf.mxu0
    %v356 = vadd.f32 %v259, %v355
    %v357 = vpop.f32.mrf.mxu0
    %358 = vmatprep.mubr.f32.mxu0 0.0
    %359 = vmatmul.mubr.f32.gmra.mxu0 %v279
    %v360 = vpop.f32.mrf.mxu0
    %v361 = vadd.f32 %v264, %v360
    %v362 = vpop.f32.mrf.mxu0
    %363 = vmatprep.mubr.f32.mxu0 0.0
    %364 = vmatmul.mubr.f32.gmra.mxu0 %v282
    %v365 = vpop.f32.mrf.mxu0
    %v366 = vadd.f32 %v269, %v365
    %v367 = vpop.f32.mrf.mxu0
    %368 = vdwg.mxu0
    %vm369 = vcmp.gt.f32.partialorder %v351, 0.0
    %vm370 = vcmp.gt.f32.partialorder %v356, 0.0
    %vm371 = vcmp.gt.f32.partialorder %v361, 0.0
    %vm372 = vcmp.gt.f32.partialorder %v366, 0.0
    %v373 = vmul.f32 %v351, 0.01
    %v374 = vmul.f32 %v356, 0.01
    %v375 = vmul.f32 %v361, 0.01
    %v376 = vmul.f32 %v366, 0.01
    %v377 = vsel %vm369, %v351, %v373
    %v378 = vsel %vm370, %v356, %v374
    %v379 = vsel %vm371, %v361, %v375
    %v380 = vsel %vm372, %v366, %v376
    %v381 = vadd.f32 %v377, %v378
    %v382 = vadd.f32 %v381, %v379
    %v383 = vadd.f32 %v382, %v380
    %v384 = vrot.slane %v383, 4
    %v385 = vadd.f32 %v383, %v384
    %v386 = vrot.slane %v385, 2
    %v387 = vadd.f32 %v385, %v386
    %v388 = vrot.slane %v387, 1
    %v389 = vadd.f32 %v387, %v388
    %v390 = vmul.f32 %v389, %v175
    %v391 = vmul.f32 %v377, %v377
    %v392 = vmul.f32 %v378, %v378
    %v393 = vmul.f32 %v379, %v379
    %v394 = vmul.f32 %v380, %v380
    %v395 = vadd.f32 %v391, %v392
    %v396 = vadd.f32 %v395, %v393
    %v397 = vadd.f32 %v396, %v394
    %v398 = vrot.slane %v397, 4
    %v399 = vadd.f32 %v397, %v398
    %v400 = vrot.slane %v399, 2
    %v401 = vadd.f32 %v399, %v400
    %v402 = vrot.slane %v401, 1
    %v403 = vadd.f32 %v401, %v402
    %v404 = vmul.f32 %v403, %v175
    %v405 = vmul.f32 %v390, %v390
    %v406 = vsub.f32 %v404, %v405
    %v407 = vsub.f32 %v377, %v390
    %v408 = vsub.f32 %v378, %v390
    %v409 = vsub.f32 %v379, %v390
    %v410 = vsub.f32 %v380, %v390
    %v411 = vadd.f32 %v406, 1e-05
    %v412 = vrsqrt.pop %v411
    %v413 = vmul.f32 %v407, %v412
    %v414 = vmul.f32 %v408, %v412
    %v415 = vmul.f32 %v409, %v412
    %v416 = vmul.f32 %v410, %v412
    %417 = vset.pattern.permute.xlu0 1
    %418 = vperm.xlu0 %417, %v247
    %v419 = vpop.permute.xlu0 %418
    %421 = vset.pattern.permute.xlu0 1
    %422 = vperm.xlu0 %421, %v248
    %v423 = vpop.permute.xlu0 %422
    %425 = vset.pattern.permute.xlu0 1
    %426 = vperm.xlu0 %425, %v249
    %v427 = vpop.permute.xlu0 %426
    %429 = vset.pattern.permute.xlu0 1
    %430 = vperm.xlu0 %429, %v250
    %v431 = vpop.permute.xlu0 %430
    %v433 = vmul.f32 %v413, %v419
    %v434 = vmul.f32 %v414, %v423
    %v435 = vmul.f32 %v415, %v427
    %v436 = vmul.f32 %v416, %v431
    %437 = vset.pattern.permute.xlu0 2
    %438 = vperm.xlu0 %437, %v247
    %v439 = vpop.permute.xlu0 %438
    %441 = vset.pattern.permute.xlu0 2
    %442 = vperm.xlu0 %441, %v248
    %v443 = vpop.permute.xlu0 %442
    %445 = vset.pattern.permute.xlu0 2
    %446 = vperm.xlu0 %445, %v249
    %v447 = vpop.permute.xlu0 %446
    %449 = vset.pattern.permute.xlu0 2
    %450 = vperm.xlu0 %449, %v250
    %v451 = vpop.permute.xlu0 %450
    %v453 = vadd.f32 %v433, %v439
    %v454 = vadd.f32 %v434, %v443
    %v455 = vadd.f32 %v435, %v447
    %v456 = vadd.f32 %v436, %v451
    %v457 = vld [vmem:[%s5] sm:$0xff]
    %v458 = vld [vmem:[%s5 + $0x8] sm:$0xff]
    %v459 = vld [vmem:[%s6] sm:$0xff]
    %v460 = vld [vmem:[%s6 + $0x8] sm:$0xff]
    %462 = vset.pattern.permute.xlu0 0
    %463 = vperm.xlu0 %462, %v459
    %v464 = vpop.permute.xlu0 %463
    %467 = vset.pattern.permute.xlu0 0
    %468 = vperm.xlu0 %467, %v460
    %v469 = vpop.permute.xlu0 %468
    %v472 = vsel %vm271, %v457, 0
    %v475 = vsel %vm271, %v458, 0
    %477 = vmatprep.subr.mxu0 0.0
    %478 = vmatpush1.msra.mxu0 0.0
    %479 = vmatprep.subr.mxu0 0.0
    %480 = vmatpush1.msra.mxu0 0.0
    %481 = vmatprep.subr.mxu0 0.0
    %482 = vmatpush1.msra.mxu0 0.0
    %483 = vmatprep.subr.mxu0 0.0
    %484 = vmatpush1.msra.mxu0 0.0
    %485 = vmatprep.subr.mxu0 0.0
    %486 = vmatpush1.msra.mxu0 0.0
    %487 = vmatprep.subr.mxu0 0.0
    %488 = vmatpush1.msra.mxu0 0.0
    %489 = vmatprep.subr.mxu0 0.0
    %490 = vmatpush1.msra.mxu0 0.0
    %491 = vmatprep.subr.mxu0 0.0
    %492 = vmatpush1.msra.mxu0 0.0
    %493 = vmatprep.subr.mxu0 0.0
    %494 = vmatpush1.msra.mxu0 0.0
    %495 = vmatprep.subr.mxu0 0.0
    %496 = vmatpush1.msra.mxu0 0.0
    %497 = vmatprep.subr.mxu0 0.0
    %498 = vmatpush1.msra.mxu0 0.0
    %499 = vmatprep.subr.mxu0 0.0
    %500 = vmatpush1.msra.mxu0 0.0
    %501 = vmatprep.subr.mxu0 0.0
    %502 = vmatpush1.msra.mxu0 %v456
    %503 = vmatprep.subr.mxu0 0.0
    %504 = vmatpush1.msra.mxu0 %v455
    %505 = vmatprep.subr.mxu0 0.0
    %506 = vmatpush1.msra.mxu0 %v454
    %507 = vmatprep.subr.mxu0 0.0
    %508 = vmatpush1.msra.mxu0 %v453
    %509 = vmatprep.subr.mxu0 0.0
    %510 = vmatpush2.msra.mxu0 0.0
    %511 = vmatprep.subr.mxu0 0.0
    %512 = vmatpush2.msra.mxu0 0.0
    %513 = vmatprep.subr.mxu0 0.0
    %514 = vmatpush2.msra.mxu0 0.0
    %515 = vmatprep.subr.mxu0 0.0
    %516 = vmatpush2.msra.mxu0 0.0
    %517 = vmatprep.subr.mxu0 0.0
    %518 = vmatpush2.msra.mxu0 0.0
    %519 = vmatprep.subr.mxu0 0.0
    %520 = vmatpush2.msra.mxu0 0.0
    %521 = vmatprep.subr.mxu0 0.0
    %522 = vmatpush2.msra.mxu0 0.0
    %523 = vmatprep.subr.mxu0 0.0
    %524 = vmatpush2.msra.mxu0 0.0
    %525 = vmatprep.subr.mxu0 0.0
    %526 = vmatpush2.msra.mxu0 0.0
    %527 = vmatprep.subr.mxu0 0.0
    %528 = vmatpush2.msra.mxu0 0.0
    %529 = vmatprep.subr.mxu0 0.0
    %530 = vmatpush2.msra.mxu0 0.0
    %531 = vmatprep.subr.mxu0 0.0
    %532 = vmatpush2.msra.mxu0 0.0
    %533 = vmatprep.subr.mxu0 0.0
    %534 = vmatpush2.msra.mxu0 0.0
    %535 = vmatprep.subr.mxu0 0.0
    %536 = vmatpush2.msra.mxu0 0.0
    %537 = vmatprep.subr.mxu0 0.0
    %538 = vmatpush2.msra.mxu0 0.0
    %539 = vmatprep.subr.mxu0 0.0
    %540 = vmatpush2.msra.mxu0 0.0
    %541 = vmatprep.mubr.f32.mxu0 0.0
    %542 = vmatmul.mubr.f32.gmra.mxu0 %v472
    %v543 = vpop.f32.mrf.mxu0
    %v544 = vadd.f32 %v464, %v543
    %v545 = vpop.f32.mrf.mxu0
    %546 = vmatprep.mubr.f32.mxu0 0.0
    %547 = vmatmul.mubr.f32.gmra.mxu0 %v475
    %v548 = vpop.f32.mrf.mxu0
    %v549 = vadd.f32 %v469, %v548
    %v550 = vpop.f32.mrf.mxu0
    %551 = vdwg.mxu0
    %552 = vst [vmem:[#allocation2] sm:$0xff] %v544
    %553 = vst [vmem:[#allocation2 + $0x8] sm:$0xff] %v549
    // Predicated region
    $region30: #{tpu_custom_call.1} parent=1 // pred_check
      _
    $region31: #{tpu_custom_call.1} parent=1 // pred_check_branch
      %555 = sbr.rel (0) target = $region33
    $region32: #{tpu_custom_call.1} parent=1 // pred_region
      %s557 = ssub.s32 256, 256
      %558 = vsyncadd [#allocation3], %s557
      %s559 = sshll.u32 [#allocation2], 4
      %s560 = int_to_ptr.vmem [resolvable:$true] %s559
      %565 = dma.vmem_to_hbm [thread:$0]  %s560, 256, %s7, [#allocation3], 128, 128, 8
    $region33: #{tpu_custom_call.1} parent=1 // pred_fallthru
      _
    // Predicated region
    $region34: #{tpu_custom_call.1} parent=1 // pred_check
      _
    $region35: #{tpu_custom_call.1} parent=1 // pred_check_branch
      %567 = sbr.rel (0) target = $region37
    $region36: #{tpu_custom_call.1} parent=1 // pred_region
      %568 = dma.done [#allocation3], 256
    $region37: #{tpu_custom_call.1} parent=1 // pred_fallthru
      _
    %569 = vsyncpa [#allocation3], 1

</llo_original>
